<compile_context>
chip_gen: v6e
topology: v6e:2x2x1
jax: 0.10.0
libtpu: 0.0.40
codegen_flags: <defaults>
</compile_context>

<pallas_src>
import functools

import jax
import jax.numpy as jnp
from jax.experimental import pallas as pl
from jax.experimental.pallas import tpu as pltpu


def _var_conv_kernel(x_ref, w_ref, b_ref, g_ref, beta_ref, o_ref, slab_ref,
                     *, tm, ksize, x_off, read_off, t_len, eps, fold_taps):
    # x_ref:    (1, T, C_in)      raw (unpadded) time slab for this batch elem
    # w_ref:    (K, C_in, C_out)  conv weight, pre-transposed, storage dtype
    # b_ref:    (1, C_out) f32    conv bias
    # g_ref:    (1, C_out) f32    LayerNorm gamma
    # beta_ref: (1, C_out) f32    LayerNorm beta
    # o_ref:    (1, TM, C_out)    output tile (storage dtype)
    # slab_ref: (T_slab, C_in) f32 scratch: zero halo + x copy, built per batch
    ti = pl.program_id(1)

    # Build the zero-padded slab once per batch element (VMEM -> VMEM only).
    @pl.when(ti == 0)
    def _():
        slab_ref[...] = jnp.zeros_like(slab_ref)
        slab_ref[x_off:x_off + t_len, :] = x_ref[0].astype(slab_ref.dtype)

    t0 = pl.multiple_of(ti * tm, tm)
    w_dtype = w_ref.dtype
    c_in = slab_ref.shape[-1]
    c_out = o_ref.shape[-1]

    if fold_taps:
        # Single MXU matmul with contraction depth K*C_in (lane-aligned C_in).
        lhs = jnp.concatenate(
            [slab_ref[pl.ds(read_off + t0 + k, tm), :] for k in range(ksize)],
            axis=-1).astype(w_dtype)
        acc = jnp.dot(lhs, w_ref[...].reshape(ksize * c_in, c_out),
                      preferred_element_type=jnp.float32)
    else:
        # K small matmuls (general C_in); LHS cast to the weight dtype so bf16
        # weights get the native bf16 MXU path, f32 accumulation either way.
        acc = None
        for k in range(ksize):
            lhs_k = slab_ref[pl.ds(read_off + t0 + k, tm), :].astype(w_dtype)
            part = jnp.dot(lhs_k, w_ref[k], preferred_element_type=jnp.float32)
            acc = part if acc is None else acc + part

    acc = acc + b_ref[...]               # conv bias, (1, C_out) broadcast
    acc = jnp.maximum(acc, 0.0)          # ReLU

    # LayerNorm over the channel (last) dim; biased variance, eps inside sqrt.
    mean = jnp.mean(acc, axis=-1, keepdims=True)
    ctr = acc - mean
    var = jnp.mean(ctr * ctr, axis=-1, keepdims=True)
    y = ctr * jax.lax.rsqrt(var + eps) * g_ref[...] + beta_ref[...]

    # TODO(synk): nn.Dropout is identity in eval/inference; training-mode
    # dropout would draw a mask via pltpu.prng_seed + pltpu.stateful_bernoulli.
    o_ref[0, :, :] = y.astype(o_ref.dtype)


def variance_convolution_layer(x, weight, bias, gamma, beta, *, eps=1e-5, tm=256):
    """Fused Conv1d('same') + bias + ReLU + LayerNorm.

    x: (B, T, C_in)  (f32 or bf16), weight: (C_out, C_in, K) with odd K,
    bias / gamma / beta: (C_out,).  Returns (B, T, C_out) in x.dtype.
    """
    B, T, C_in = x.shape
    C_out, _, K = weight.shape
    assert K % 2 == 1, "kernel_size must be odd for 'same' Conv1d padding"
    pad = (K - 1) // 2

    n_t = pl.cdiv(T, tm)
    T_round = n_t * tm
    # x lives at slab rows [x_off, x_off+T); x_off is sublane-aligned so the
    # per-batch slab fill is an aligned store.  read_off absorbs the conv halo.
    x_off = ((pad + 7) // 8) * 8 if pad > 0 else 0
    read_off = x_off - pad
    T_slab = x_off + T_round + pad

    # Keep x / weight in storage dtype (bf16 stays bf16 through HBM & MXU).
    w_k = jnp.transpose(weight, (2, 1, 0)).astype(x.dtype)   # (K, C_in, C_out)
    b_row = bias.reshape(1, C_out).astype(jnp.float32)
    g_row = gamma.reshape(1, C_out).astype(jnp.float32)
    beta_row = beta.reshape(1, C_out).astype(jnp.float32)

    fold_taps = (K > 1) and (C_in % 128 == 0)

    kernel = functools.partial(
        _var_conv_kernel, tm=tm, ksize=K, x_off=x_off, read_off=read_off,
        t_len=T, eps=eps, fold_taps=fold_taps)

    itemsize = x.dtype.itemsize
    # VMEM footprint: x block (double-buffered over batch) + f32 scratch slab +
    # weight (2 bufs) + param rows + 2 output tile buffers.
    vmem_bytes = (2 * T * C_in * itemsize
                  + T_slab * C_in * 4
                  + 2 * K * C_in * C_out * itemsize
                  + 6 * C_out * 4
                  + 2 * tm * C_out * itemsize)
    vmem_limit = int(min(64 * 1024 * 1024,
                         max(32 * 1024 * 1024, (vmem_bytes * 3) // 2)))

    flops = 2 * B * T_round * K * C_in * C_out + 10 * B * T_round * C_out
    bytes_accessed = (B * T * C_in * itemsize
                      + K * C_in * C_out * itemsize
                      + 12 * C_out
                      + B * T_round * C_out * itemsize)

    out = pl.pallas_call(
        kernel,
        out_shape=jax.ShapeDtypeStruct((B, T_round, C_out), x.dtype),
        grid_spec=pltpu.PrefetchScalarGridSpec(
            num_scalar_prefetch=0,
            grid=(B, n_t),
            in_specs=[
                # Raw x slab for this batch element, resident across time tiles.
                pl.BlockSpec((1, T, C_in), lambda b, t: (b, 0, 0)),
                pl.BlockSpec((K, C_in, C_out), lambda b, t: (0, 0, 0)),
                pl.BlockSpec((1, C_out), lambda b, t: (0, 0)),
                pl.BlockSpec((1, C_out), lambda b, t: (0, 0)),
                pl.BlockSpec((1, C_out), lambda b, t: (0, 0)),
            ],
            out_specs=pl.BlockSpec((1, tm, C_out), lambda b, t: (b, t, 0)),
            scratch_shapes=[pltpu.VMEM((T_slab, C_in), jnp.float32)],
        ),
        compiler_params=pltpu.CompilerParams(
            # Batch parallel (megacore-shardable), time sequential per core so
            # the resident slab is not duplicated and the slab init ordering
            # (ti == 0 first) is respected.
            dimension_semantics=("parallel", "arbitrary"),
            vmem_limit_bytes=vmem_limit),
        cost_estimate=pl.CostEstimate(
            flops=flops,
            transcendentals=B * T_round,
            bytes_accessed=bytes_accessed),
    )(x, w_k, b_row, g_row, beta_row)

    return out[:, :T, :]


def _reference(x, weight, bias, gamma, beta, eps=1e-5):
    B, T, C_in = x.shape
    C_out, _, K = weight.shape
    pad = (K - 1) // 2
    x_p = jnp.pad(x, ((0, 0), (pad, pad), (0, 0)))
    y = jnp.zeros((B, T, C_out), jnp.float32)
    for k in range(K):
        y = y + jnp.einsum('btc,oc->bto', x_p[:, k:k + T, :], weight[:, :, k])
    y = y + bias
    y = jnp.maximum(y, 0.0)
    mean = jnp.mean(y, axis=-1, keepdims=True)
    var = jnp.mean((y - mean) ** 2, axis=-1, keepdims=True)
    return (y - mean) / jnp.sqrt(var + eps) * gamma + beta


if __name__ == "__main__":
    key = jax.random.PRNGKey(0)
    k1, k2, k3, k4, k5 = jax.random.split(key, 5)

    # Config A: small channels (per-tap MXU path). batch=2, seq=16, in=8, out=32, K=3.
    B, T, C_in, C_out, K = 2, 16, 8, 32, 3
    x = jax.random.normal(k1, (B, T, C_in), jnp.float32)
    weight = 0.1 * jax.random.normal(k2, (C_out, C_in, K), jnp.float32)
    bias = 0.1 * jax.random.normal(k3, (C_out,), jnp.float32)
    gamma = 1.0 + 0.1 * jax.random.normal(k4, (C_out,), jnp.float32)
    beta = 0.1 * jax.random.normal(k5, (C_out,), jnp.float32)

    # tm=8 at this toy size so the grid has multiple time tiles (exercises the
    # per-batch slab init); use the default tm=256 for realistic lengths.
    out = variance_convolution_layer(x, weight, bias, gamma, beta, tm=8)
    out = jax.block_until_ready(out)
    ref = _reference(x, weight, bias, gamma, beta)
    assert out.shape == (B, T, C_out)
    assert jnp.allclose(out, ref, atol=1e-4, rtol=1e-4), \
        float(jnp.max(jnp.abs(out - ref)))

    # Config A with bf16 storage (halved HBM traffic, bf16 MXU, f32 accumulate).
    out_bf16 = variance_convolution_layer(
        x.astype(jnp.bfloat16), weight.astype(jnp.bfloat16),
        bias, gamma, beta, tm=8)
    out_bf16 = jax.block_until_ready(out_bf16)
    assert out_bf16.dtype == jnp.bfloat16
    assert float(jnp.max(jnp.abs(out_bf16.astype(jnp.float32) - ref))) < 0.35

    # Config B: lane-aligned channels -> folded single-matmul conv + lane-dense output.
    C_in2, C_out2 = 128, 128
    kk = jax.random.split(jax.random.PRNGKey(1), 5)
    x2 = jax.random.normal(kk[0], (B, T, C_in2), jnp.float32)
    w2 = 0.05 * jax.random.normal(kk[1], (C_out2, C_in2, K), jnp.float32)
    b2 = 0.1 * jax.random.normal(kk[2], (C_out2,), jnp.float32)
    g2 = 1.0 + 0.1 * jax.random.normal(kk[3], (C_out2,), jnp.float32)
    be2 = 0.1 * jax.random.normal(kk[4], (C_out2,), jnp.float32)
    out2 = variance_convolution_layer(x2, w2, b2, g2, be2, tm=8)
    out2 = jax.block_until_ready(out2)
    ref2 = _reference(x2, w2, b2, g2, be2)
    assert jnp.allclose(out2, ref2, atol=2e-3, rtol=2e-3), \
        float(jnp.max(jnp.abs(out2 - ref2)))

    print("KERNEL_OK")
</pallas_src>

<mosaic_0001>
module attributes {stable_mosaic.version = 11 : i64} {
  func.func @_var_conv_kernel(%arg0: i32, %arg1: i32, %arg2: memref<1x16x8xf32, #tpu.memory_space<vmem>>, %arg3: memref<3x8x32xf32, #tpu.memory_space<vmem>>, %arg4: memref<1x32xf32, #tpu.memory_space<vmem>>, %arg5: memref<1x32xf32, #tpu.memory_space<vmem>>, %arg6: memref<1x32xf32, #tpu.memory_space<vmem>>, %arg7: memref<1x8x32xf32, #tpu.memory_space<vmem>>, %arg8: memref<25x8xf32, #tpu.memory_space<vmem>>) attributes {dimension_semantics = [#tpu.dimension_semantics<parallel>, #tpu.dimension_semantics<arbitrary>], iteration_bounds = array<i64: 2, 2>, scalar_prefetch = 0 : i64, scratch_operands = 1 : i64, tpu.core_type = #tpu.core_type<tc>, window_params = [{transform_indices = @transform_0, window_bounds = array<i64: 1, 16, 8>}, {pipeline_mode = #tpu.pipeline_mode<synchronous>, transform_indices = @transform_1, window_bounds = array<i64: 3, 8, 32>}, {pipeline_mode = #tpu.pipeline_mode<synchronous>, transform_indices = @transform_2, window_bounds = array<i64: 1, 32>}, {pipeline_mode = #tpu.pipeline_mode<synchronous>, transform_indices = @transform_3, window_bounds = array<i64: 1, 32>}, {pipeline_mode = #tpu.pipeline_mode<synchronous>, transform_indices = @transform_4, window_bounds = array<i64: 1, 32>}, {transform_indices = @transform_5, window_bounds = array<i64: 1, 8, 32>}]} {
    %c0_i32 = arith.constant 0 : i32
    %0 = arith.cmpi eq, %arg1, %c0_i32 : i32
    %1 = arith.extui %0 : i1 to i32
    %c0_i32_0 = arith.constant 0 : i32
    %2 = arith.cmpi ne, %1, %c0_i32_0 : i32
    scf.if %2 {
      %cst_30 = arith.constant 0.000000e+00 : f32
      %58 = vector.broadcast %cst_30 : f32 to vector<25x8xf32>
      %c0_31 = arith.constant 0 : index
      %c0_32 = arith.constant 0 : index
      %59 = vector.load %arg8[%c0_31, %c0_32] : memref<25x8xf32, #tpu.memory_space<vmem>>, vector<25x8xf32>
      tpu.vector_store %arg8[%c0_31, %c0_32], %58 {strides = array<i32>} : memref<25x8xf32, #tpu.memory_space<vmem>>, vector<25x8xf32>,
      %c0_33 = arith.constant 0 : index
      %c0_34 = arith.constant 0 : index
      %c0_35 = arith.constant 0 : index
      %60 = vector.load %arg2[%c0_33, %c0_34, %c0_35] : memref<1x16x8xf32, #tpu.memory_space<vmem>>, vector<1x16x8xf32>
      %61 = vector.shape_cast %60 : vector<1x16x8xf32> to vector<16x8xf32>
      %c8 = arith.constant 8 : index
      %c0_36 = arith.constant 0 : index
      %62 = vector.load %arg8[%c8, %c0_36] : memref<25x8xf32, #tpu.memory_space<vmem>>, vector<16x8xf32>
      tpu.vector_store %arg8[%c8, %c0_36], %61 {strides = array<i32>} : memref<25x8xf32, #tpu.memory_space<vmem>>, vector<16x8xf32>,
    } else {
    }
    %c8_i32 = arith.constant 8 : i32
    %3 = arith.muli %arg1, %c8_i32 : i32
    %4 = tpu.assume_multiple %3, 8 : i32
    %c7_i32 = arith.constant 7 : i32
    %5 = arith.addi %c7_i32, %4 : i32
    %c0_i32_1 = arith.constant 0 : i32
    %6 = arith.addi %5, %c0_i32_1 : i32
    %7 = arith.index_cast %6 : i32 to index
    %c0 = arith.constant 0 : index
    %8 = vector.load %arg8[%7, %c0] : memref<25x8xf32, #tpu.memory_space<vmem>>, vector<8x8xf32>
    %c0_2 = arith.constant 0 : index
    %c0_3 = arith.constant 0 : index
    %c0_4 = arith.constant 0 : index
    %9 = vector.load %arg3[%c0_2, %c0_3, %c0_4] : memref<3x8x32xf32, #tpu.memory_space<vmem>>, vector<1x8x32xf32>
    %10 = vector.shape_cast %9 : vector<1x8x32xf32> to vector<8x32xf32>
    %cst = arith.constant dense<0.000000e+00> : vector<8x32xf32>
    %11 = tpu.matmul %8, %10, %cst {dimension_numbers = #tpu.dot_dimension_numbers<[1], [0], [0], [1], [0, 0, 1, 1], [], []>} : vector<8x8xf32>, vector<8x32xf32>, vector<8x32xf32> -> vector<8x32xf32>
    %c7_i32_5 = arith.constant 7 : i32
    %12 = arith.addi %c7_i32_5, %4 : i32
    %c1_i32 = arith.constant 1 : i32
    %13 = arith.addi %12, %c1_i32 : i32
    %14 = arith.index_cast %13 : i32 to index
    %c0_6 = arith.constant 0 : index
    %15 = vector.load %arg8[%14, %c0_6] : memref<25x8xf32, #tpu.memory_space<vmem>>, vector<8x8xf32>
    %c1 = arith.constant 1 : index
    %c0_7 = arith.constant 0 : index
    %c0_8 = arith.constant 0 : index
    %16 = vector.load %arg3[%c1, %c0_7, %c0_8] : memref<3x8x32xf32, #tpu.memory_space<vmem>>, vector<1x8x32xf32>
    %17 = vector.shape_cast %16 : vector<1x8x32xf32> to vector<8x32xf32>
    %cst_9 = arith.constant dense<0.000000e+00> : vector<8x32xf32>
    %18 = tpu.matmul %15, %17, %cst_9 {dimension_numbers = #tpu.dot_dimension_numbers<[1], [0], [0], [1], [0, 0, 1, 1], [], []>} : vector<8x8xf32>, vector<8x32xf32>, vector<8x32xf32> -> vector<8x32xf32>
    %19 = arith.addf %11, %18 : vector<8x32xf32>
    %c7_i32_10 = arith.constant 7 : i32
    %20 = arith.addi %c7_i32_10, %4 : i32
    %c2_i32 = arith.constant 2 : i32
    %21 = arith.addi %20, %c2_i32 : i32
    %22 = arith.index_cast %21 : i32 to index
    %c0_11 = arith.constant 0 : index
    %23 = vector.load %arg8[%22, %c0_11] : memref<25x8xf32, #tpu.memory_space<vmem>>, vector<8x8xf32>
    %c2 = arith.constant 2 : index
    %c0_12 = arith.constant 0 : index
    %c0_13 = arith.constant 0 : index
    %24 = vector.load %arg3[%c2, %c0_12, %c0_13] : memref<3x8x32xf32, #tpu.memory_space<vmem>>, vector<1x8x32xf32>
    %25 = vector.shape_cast %24 : vector<1x8x32xf32> to vector<8x32xf32>
    %cst_14 = arith.constant dense<0.000000e+00> : vector<8x32xf32>
    %26 = tpu.matmul %23, %25, %cst_14 {dimension_numbers = #tpu.dot_dimension_numbers<[1], [0], [0], [1], [0, 0, 1, 1], [], []>} : vector<8x8xf32>, vector<8x32xf32>, vector<8x32xf32> -> vector<8x32xf32>
    %27 = arith.addf %19, %26 : vector<8x32xf32>
    %c0_15 = arith.constant 0 : index
    %c0_16 = arith.constant 0 : index
    %28 = vector.load %arg4[%c0_15, %c0_16] : memref<1x32xf32, #tpu.memory_space<vmem>>, vector<1x32xf32>
    %29 = vector.broadcast %28 : vector<1x32xf32> to vector<8x32xf32>
    %30 = arith.addf %27, %29 : vector<8x32xf32>
    %cst_17 = arith.constant 0.000000e+00 : f32
    %31 = vector.broadcast %cst_17 : f32 to vector<8x32xf32>
    %32 = arith.maximumf %30, %31 : vector<8x32xf32>
    %cst_18 = arith.constant dense<0.000000e+00> : vector<8xf32>
    %33 = vector.multi_reduction <add>, %32, %cst_18 [1] : vector<8x32xf32> to vector<8xf32>
    %34 = vector.shape_cast %33 : vector<8xf32> to vector<8x1xf32>
    %cst_19 = arith.constant 3.200000e+01 : f32
    %35 = vector.broadcast %cst_19 : f32 to vector<8x1xf32>
    %36 = arith.divf %34, %35 : vector<8x1xf32>
    %37 = vector.broadcast %36 : vector<8x1xf32> to vector<8x32xf32>
    %38 = arith.subf %32, %37 : vector<8x32xf32>
    %39 = arith.mulf %38, %38 : vector<8x32xf32>
    %cst_20 = arith.constant dense<0.000000e+00> : vector<8xf32>
    %40 = vector.multi_reduction <add>, %39, %cst_20 [1] : vector<8x32xf32> to vector<8xf32>
    %41 = vector.shape_cast %40 : vector<8xf32> to vector<8x1xf32>
    %cst_21 = arith.constant 3.200000e+01 : f32
    %42 = vector.broadcast %cst_21 : f32 to vector<8x1xf32>
    %43 = arith.divf %41, %42 : vector<8x1xf32>
    %cst_22 = arith.constant 9.99999974E-6 : f32
    %44 = vector.broadcast %cst_22 : f32 to vector<8x1xf32>
    %45 = arith.addf %43, %44 : vector<8x1xf32>
    %46 = math.rsqrt %45 : vector<8x1xf32>
    %47 = vector.broadcast %46 : vector<8x1xf32> to vector<8x32xf32>
    %48 = arith.mulf %38, %47 : vector<8x32xf32>
    %c0_23 = arith.constant 0 : index
    %c0_24 = arith.constant 0 : index
    %49 = vector.load %arg5[%c0_23, %c0_24] : memref<1x32xf32, #tpu.memory_space<vmem>>, vector<1x32xf32>
    %50 = vector.broadcast %49 : vector<1x32xf32> to vector<8x32xf32>
    %51 = arith.mulf %48, %50 : vector<8x32xf32>
    %c0_25 = arith.constant 0 : index
    %c0_26 = arith.constant 0 : index
    %52 = vector.load %arg6[%c0_25, %c0_26] : memref<1x32xf32, #tpu.memory_space<vmem>>, vector<1x32xf32>
    %53 = vector.broadcast %52 : vector<1x32xf32> to vector<8x32xf32>
    %54 = arith.addf %51, %53 : vector<8x32xf32>
    %c0_27 = arith.constant 0 : index
    %c0_28 = arith.constant 0 : index
    %c0_29 = arith.constant 0 : index
    %55 = vector.load %arg7[%c0_27, %c0_28, %c0_29] : memref<1x8x32xf32, #tpu.memory_space<vmem>>, vector<1x8x32xf32>
    %56 = vector.shape_cast %55 : vector<1x8x32xf32> to vector<8x32xf32>
    %57 = vector.shape_cast %54 : vector<8x32xf32> to vector<1x8x32xf32>
    tpu.vector_store %arg7[%c0_27, %c0_28, %c0_29], %57 {strides = array<i32>} : memref<1x8x32xf32, #tpu.memory_space<vmem>>, vector<1x8x32xf32>,
    return
  }
  func.func @transform_0(%arg0: i32, %arg1: i32) -> (i32, i32, i32) {
    %c0_i32 = arith.constant 0 : i32
    %c0_i32_0 = arith.constant 0 : i32
    %c0_i32_1 = arith.constant 0 : i32
    return %arg0, %c0_i32, %c0_i32_0 : i32, i32, i32
  }
  func.func @transform_1(%arg0: i32, %arg1: i32) -> (i32, i32, i32) {
    %c0_i32 = arith.constant 0 : i32
    %c0_i32_0 = arith.constant 0 : i32
    %c0_i32_1 = arith.constant 0 : i32
    %c0_i32_2 = arith.constant 0 : i32
    return %c0_i32, %c0_i32_0, %c0_i32_1 : i32, i32, i32
  }
  func.func @transform_2(%arg0: i32, %arg1: i32) -> (i32, i32) {
    %c0_i32 = arith.constant 0 : i32
    %c0_i32_0 = arith.constant 0 : i32
    %c0_i32_1 = arith.constant 0 : i32
    return %c0_i32, %c0_i32_0 : i32, i32
  }
  func.func @transform_3(%arg0: i32, %arg1: i32) -> (i32, i32) {
    %c0_i32 = arith.constant 0 : i32
    %c0_i32_0 = arith.constant 0 : i32
    %c0_i32_1 = arith.constant 0 : i32
    return %c0_i32, %c0_i32_0 : i32, i32
  }
  func.func @transform_4(%arg0: i32, %arg1: i32) -> (i32, i32) {
    %c0_i32 = arith.constant 0 : i32
    %c0_i32_0 = arith.constant 0 : i32
    %c0_i32_1 = arith.constant 0 : i32
    return %c0_i32, %c0_i32_0 : i32, i32
  }
  func.func @transform_5(%arg0: i32, %arg1: i32) -> (i32, i32, i32) {
    %c0_i32 = arith.constant 0 : i32
    %c0_i32_0 = arith.constant 0 : i32
    return %arg0, %arg1, %c0_i32 : i32, i32, i32
  }
}

</mosaic_0001>

<llo_original>
// kernel: tpu_custom_call.1
$region0: #{tpu_custom_call.1}
  #allocation0 [shape = 'u32[]', space=smem, size = 0x4, offset = 0x4, fixed_abs, tag = 'smem constant byte address 0x4 - core index']
  #allocation1 [shape = 'u32[144,128]{1,0:T(1,128)}', space=vmem, size = 0x12000, scoped, tag = 'internal scratch']
  #allocation2 [shape = 'f32[25,8]{1,0:T(8,128)}', space=vmem, size = 0x4000, scoped, tag = 'scratch operand']
  %s0 = inlined_call_operand.vmem [shape: f32[2,16,8], index: 0, kind: input, shape index: {}]
  %s1 = inlined_call_operand.vmem [shape: f32[3,8,32], index: 1, kind: input, shape index: {}]
  %s2 = inlined_call_operand.vmem [shape: f32[1,32], index: 2, kind: input, shape index: {}]
  %s3 = inlined_call_operand.vmem [shape: f32[1,32], index: 3, kind: input, shape index: {}]
  %s4 = inlined_call_operand.vmem [shape: f32[1,32], index: 4, kind: input, shape index: {}]
  %s5 = inlined_call_operand.hbm [shape: f32[2,16,32], index: 5, kind: output, shape index: {}]
  %s6 = sld [smem:[#allocation0]]
  $region57: #{tpu_custom_call.1} parent=0
    _
  %s8 = ssub.s32 1, %s6
  %s9 = scalar_select 0, %s8, %s6
  $region1: #{tpu_custom_call.1} parent=0
    #allocation3 [shape = 'u8[8192]{0}', space=vmem, size = 0x2000, scoped, tag = 'output window, operand 0']
    #allocation4 [shape = 's32[2]{0}', space=sflag, size = 0x8, scoped, tag = 'scoped memory for tpu_custom_call.1']
    %10 = vsyncpa [#allocation4], 0
    %s11 = scalar_lea.sflag [#allocation4], 1
    %12 = vsyncpa %s11, 0
    loop: start=0, step=1, limit=6
    $region2: #{tpu_custom_call.1} parent=1 // loop_pre_header
      _
    $region3: #{tpu_custom_call.1} parent=1 // loop_header
      %s14 = sphi 0, %s18
      %p15 = scmp.ge.s32.totalorder %s14, 6
      %s21 = sphi 0, %s33
      %s22 = sphi 0, %s29
      %s23 = sphi 0, %s21
      %s24 = sphi 0, %s22
      %s25 = sphi 0, %s23
      %s26 = sphi 0, %s24
      %s36 = sphi 0, %s38
      %s39 = sphi 0, %s36
      %s40 = sphi 0, %s39
      %s56 = sphi 0, %s40
      %s60 = sphi 0, %s60
      %s62 = sphi 0, %s60
      %s63 = sphi 0, %s62
      %s77 = sphi 0, %s63
      %s81 = sphi 0, %s81
      %s83 = sphi 0, %s81
      %s84 = sphi 0, %s83
      %s98 = sphi 0, %s84
      %s102 = sphi 0, %s102
      %s104 = sphi 0, %s102
      %s105 = sphi 0, %s104
      %s119 = sphi 0, %s105
      %s123 = sphi 0, %s123
      %s125 = sphi 0, %s123
      %s126 = sphi 0, %s125
      %s140 = sphi 0, %s126
      %s148 = sphi 0, %s150
      %s151 = sphi 0, %s148
      %s152 = sphi 0, %s151
      %s168 = sphi 0, %s152
    $region4: #{tpu_custom_call.1} parent=1 // loop_header_branch
      %17 = sbr.rel (%p15) target = $region8
    $region5: #{tpu_custom_call.1} parent=1 // loop_body
      %s19 = ssub.s32 %s14, 1
      %s20 = ssub.s32 %s14, 2
      %s27 = sadd.s32 1, %s22
      %p28 = scmp.ge.s32.totalorder %s27, 2
      %s29 = scalar_select %p28, 0, %s27
      %s30 = sadd.s32 1, %s21
      %s31 = scalar_select %p28, %s30, %s21
      %p32 = scmp.ge.s32.totalorder %s31, 2
      %s33 = scalar_select %p32, 0, %s31
      %s34 = ssub.s32 %s21, %s33
      %p35 = scmp.eq.s32.totalorder %s34, 0
      %s37 = sadd.s32 %s36, 1
      %s38 = scalar_select %p35, %s36, %s37
      %p41 = pneg %p35
      %p42 = scmp.eq.s32.totalorder %s14, 3
      %p43 = por %p41, %p42
      %p44 = scmp.ne.s32.totalorder %s36, %s39
      %p45 = scmp.eq.s32.totalorder %s14, 0
      %p46 = por %p44, %p45
      %p47 = scmp.ne.s32.totalorder %s36, %s39
      %p48 = scmp.eq.s32.totalorder %s19, 3
      %p49 = por %p47, %p48
      %p50 = scmp.ne.s32.totalorder %s39, %s40
      %p51 = scmp.eq.s32.totalorder %s19, 0
      %p52 = por %p50, %p51
      %p53 = scmp.ne.s32.totalorder %s39, %s40
      %p54 = scmp.eq.s32.totalorder %s20, 3
      %p55 = por %p53, %p54
      %p57 = scmp.ne.s32.totalorder %s40, %s56
      %p58 = scmp.eq.s32.totalorder %s20, 0
      %p59 = por %p57, %p58
      %s61 = sadd.s32 %s60, 1
      %p64 = scmp.eq.s32.totalorder %s14, 3
      %p65 = scmp.ne.s32.totalorder %s60, %s62
      %p66 = scmp.eq.s32.totalorder %s14, 0
      %p67 = por %p65, %p66
      %p68 = scmp.ne.s32.totalorder %s60, %s62
      %p69 = scmp.eq.s32.totalorder %s19, 3
      %p70 = por %p68, %p69
      %p71 = scmp.ne.s32.totalorder %s62, %s63
      %p72 = scmp.eq.s32.totalorder %s19, 0
      %p73 = por %p71, %p72
      %p74 = scmp.ne.s32.totalorder %s62, %s63
      %p75 = scmp.eq.s32.totalorder %s20, 3
      %p76 = por %p74, %p75
      %p78 = scmp.ne.s32.totalorder %s63, %s77
      %p79 = scmp.eq.s32.totalorder %s20, 0
      %p80 = por %p78, %p79
      %s82 = sadd.s32 %s81, 1
      %p85 = scmp.eq.s32.totalorder %s14, 3
      %p86 = scmp.ne.s32.totalorder %s81, %s83
      %p87 = scmp.eq.s32.totalorder %s14, 0
      %p88 = por %p86, %p87
      %p89 = scmp.ne.s32.totalorder %s81, %s83
      %p90 = scmp.eq.s32.totalorder %s19, 3
      %p91 = por %p89, %p90
      %p92 = scmp.ne.s32.totalorder %s83, %s84
      %p93 = scmp.eq.s32.totalorder %s19, 0
      %p94 = por %p92, %p93
      %p95 = scmp.ne.s32.totalorder %s83, %s84
      %p96 = scmp.eq.s32.totalorder %s20, 3
      %p97 = por %p95, %p96
      %p99 = scmp.ne.s32.totalorder %s84, %s98
      %p100 = scmp.eq.s32.totalorder %s20, 0
      %p101 = por %p99, %p100
      %s103 = sadd.s32 %s102, 1
      %p106 = scmp.eq.s32.totalorder %s14, 3
      %p107 = scmp.ne.s32.totalorder %s102, %s104
      %p108 = scmp.eq.s32.totalorder %s14, 0
      %p109 = por %p107, %p108
      %p110 = scmp.ne.s32.totalorder %s102, %s104
      %p111 = scmp.eq.s32.totalorder %s19, 3
      %p112 = por %p110, %p111
      %p113 = scmp.ne.s32.totalorder %s104, %s105
      %p114 = scmp.eq.s32.totalorder %s19, 0
      %p115 = por %p113, %p114
      %p116 = scmp.ne.s32.totalorder %s104, %s105
      %p117 = scmp.eq.s32.totalorder %s20, 3
      %p118 = por %p116, %p117
      %p120 = scmp.ne.s32.totalorder %s105, %s119
      %p121 = scmp.eq.s32.totalorder %s20, 0
      %p122 = por %p120, %p121
      %s124 = sadd.s32 %s123, 1
      %p127 = scmp.eq.s32.totalorder %s14, 3
      %p128 = scmp.ne.s32.totalorder %s123, %s125
      %p129 = scmp.eq.s32.totalorder %s14, 0
      %p130 = por %p128, %p129
      %p131 = scmp.ne.s32.totalorder %s123, %s125
      %p132 = scmp.eq.s32.totalorder %s19, 3
      %p133 = por %p131, %p132
      %p134 = scmp.ne.s32.totalorder %s125, %s126
      %p135 = scmp.eq.s32.totalorder %s19, 0
      %p136 = por %p134, %p135
      %p137 = scmp.ne.s32.totalorder %s125, %s126
      %p138 = scmp.eq.s32.totalorder %s20, 3
      %p139 = por %p137, %p138
      %p141 = scmp.ne.s32.totalorder %s126, %s140
      %p142 = scmp.eq.s32.totalorder %s20, 0
      %p143 = por %p141, %p142
      %s144 = ssub.s32 %s21, %s33
      %s145 = ssub.s32 %s22, %s29
      %s146 = sor.u32 %s144, %s145
      %p147 = scmp.eq.s32.totalorder %s146, 0
      %s149 = sadd.s32 %s148, 1
      %s150 = scalar_select %p147, %s148, %s149
      %p153 = pneg %p147
      %p154 = scmp.eq.s32.totalorder %s14, 3
      %p155 = por %p153, %p154
      %p156 = scmp.ne.s32.totalorder %s148, %s151
      %p157 = scmp.eq.s32.totalorder %s14, 0
      %p158 = por %p156, %p157
      %p159 = scmp.ne.s32.totalorder %s148, %s151
      %p160 = scmp.eq.s32.totalorder %s19, 3
      %p161 = por %p159, %p160
      %p162 = scmp.ne.s32.totalorder %s151, %s152
      %p163 = scmp.eq.s32.totalorder %s19, 0
      %p164 = por %p162, %p163
      %p165 = scmp.ne.s32.totalorder %s151, %s152
      %p166 = scmp.eq.s32.totalorder %s20, 3
      %p167 = por %p165, %p166
      %p169 = scmp.ne.s32.totalorder %s152, %s168
      %p170 = scmp.eq.s32.totalorder %s20, 0
      %p171 = por %p169, %p170
      %p172 = scmp.le.s32.totalorder 1, %s14
      %p173 = scmp.lt.s32.totalorder %s14, 5
      %p174 = pnand %p172, %p173
      %p175 = pneg %p174
      // Predicated region
      $region9: #{tpu_custom_call.1} parent=5 // pred_check
        _
      $region10: #{tpu_custom_call.1} parent=5 // pred_check_branch
        %177 = sbr.rel (%p174) target = $region12
      $region11: #{tpu_custom_call.1} parent=5 // pred_region
        %s178 = ssub.s32 %s14, 1
        // Predicated region
        $region13: #{tpu_custom_call.1} parent=11 // pred_check
          %p179 = pneg %p73
        $region14: #{tpu_custom_call.1} parent=11 // pred_check_branch
          %181 = sbr.rel (%p179) target = $region16
        $region15: #{tpu_custom_call.1} parent=11 // pred_region
          _
        $region16: #{tpu_custom_call.1} parent=11 // pred_fallthru
          _
        // Predicated region
        $region17: #{tpu_custom_call.1} parent=11 // pred_check
          %p182 = pneg %p94
        $region18: #{tpu_custom_call.1} parent=11 // pred_check_branch
          %184 = sbr.rel (%p182) target = $region20
        $region19: #{tpu_custom_call.1} parent=11 // pred_region
          _
        $region20: #{tpu_custom_call.1} parent=11 // pred_fallthru
          _
        // Predicated region
        $region21: #{tpu_custom_call.1} parent=11 // pred_check
          %p185 = pneg %p115
        $region22: #{tpu_custom_call.1} parent=11 // pred_check_branch
          %187 = sbr.rel (%p185) target = $region24
        $region23: #{tpu_custom_call.1} parent=11 // pred_region
          _
        $region24: #{tpu_custom_call.1} parent=11 // pred_fallthru
          _
        // Predicated region
        $region25: #{tpu_custom_call.1} parent=11 // pred_check
          %p188 = pneg %p136
        $region26: #{tpu_custom_call.1} parent=11 // pred_check_branch
          %190 = sbr.rel (%p188) target = $region28
        $region27: #{tpu_custom_call.1} parent=11 // pred_region
          _
        $region28: #{tpu_custom_call.1} parent=11 // pred_fallthru
          _
      $region12: #{tpu_custom_call.1} parent=5 // pred_fallthru
        _
      %p191 = scmp.lt.s32.totalorder %s14, 4
      // Predicated region
      $region29: #{tpu_custom_call.1} parent=5 // pred_check
        %p192 = pneg %p191
      $region30: #{tpu_custom_call.1} parent=5 // pred_check_branch
        %194 = sbr.rel (%p192) target = $region32
      $region31: #{tpu_custom_call.1} parent=5 // pred_region
        // Predicated region
        $region33: #{tpu_custom_call.1} parent=31 // pred_check
          %p195 = pneg %p46
        $region34: #{tpu_custom_call.1} parent=31 // pred_check_branch
          %197 = sbr.rel (%p195) target = $region36
        $region35: #{tpu_custom_call.1} parent=31 // pred_region
          %p198 = scmp.lt.s32.totalorder %s21, 1
          %s199 = scalar_select %p198, %s21, 1
          %s200 = smul.addr %s199, 2
          %s201 = smul.addr %s200, 8
          %s202 = scalar_lea.vmem %s0, %s201
        $region36: #{tpu_custom_call.1} parent=31 // pred_fallthru
          _
      $region32: #{tpu_custom_call.1} parent=5 // pred_fallthru
        _
      %p203 = scmp.le.s32.totalorder 1, %s14
      %p204 = scmp.lt.s32.totalorder %s14, 5
      %p205 = pnand %p203, %p204
      %p206 = pneg %p205
      // Predicated region
      $region37: #{tpu_custom_call.1} parent=5 // pred_check
        _
      $region38: #{tpu_custom_call.1} parent=5 // pred_check_branch
        %208 = sbr.rel (%p205) target = $region40
      $region39: #{tpu_custom_call.1} parent=5 // pred_region
        %s209 = ssub.s32 %s14, 1
        %p210 = scmp.lt.s32.totalorder %s23, 1
        %s211 = scalar_select %p210, %s23, 1
        %s212 = smul.addr %s211, 2
        %s213 = smul.addr %s212, 8
        %s214 = scalar_lea.vmem %s0, %s213
        %p215 = pneg %p52
        %p216 = pneg %p49
        %p217 = pneg %p73
        %p218 = pneg %p70
        %p219 = pneg %p94
        %p220 = pneg %p91
        %p221 = pneg %p115
        %p222 = pneg %p112
        %p223 = pneg %p136
        %p224 = pneg %p133
        %p225 = pneg %p164
        %p226 = pneg %p161
        %s227 = sand.u32 %s151, 1
        %s228 = scalar_lea.sflag [#allocation4], %s227
        %s229 = sand.u32 %s151, 1
        %s230 = smul.addr %s229, 8
        %s231 = scalar_lea.vmem [#allocation3], %s230
        %p232 = scmp.lt.s32.totalorder %s23, 1
        %s233 = scalar_select %p232, %s23, 1
        %s234 = smul.addr %s233, 2
        %s235 = smul.addr %s234, 8
        %s236 = scalar_lea.vmem %s0, %s235
        %p237 = scmp.eq.s32.totalorder %s24, 0
        // Predicated region
        $region41: #{tpu_custom_call.1} parent=39 // pred_check
          %p238 = pneg %p237
        $region42: #{tpu_custom_call.1} parent=39 // pred_check_branch
          %240 = sbr.rel (%p238) target = $region44
        $region43: #{tpu_custom_call.1} parent=39 // pred_region
          %vm241 = vcmask 64512
          %242 = vst.msk [vmem:[#allocation2] sm:$0xff] %vm241, 0.0
          %243 = vst.msk [vmem:[#allocation2 + $0x8] sm:$0xff] %vm241, 0.0
          %244 = vst.msk [vmem:[#allocation2 + $0x10] sm:$0xff] %vm241, 0.0
          %vm245 = vcmask 57344
          %246 = vst.msk [vmem:[#allocation2 + $0x18] sm:$0x1] %vm245, 0.0
          %v247 = vld [vmem:[%s236] sm:$0xff]
          %v248 = vld [vmem:[%s236 + $0x8] sm:$0xff]
          %249 = vst.msk [vmem:[#allocation2 + $0x8] sm:$0xff] %vm241, %v247
          %250 = vst.msk [vmem:[#allocation2 + $0x10] sm:$0xff] %vm241, %v248
        $region44: #{tpu_custom_call.1} parent=39 // pred_fallthru
          _
        %s251 = smul.u32 %s24, 8
        %s252 = sadd.s32 %s251, 7
        %s253 = scalar_lea.vmem [#allocation2], %s252
        %v254 = vld [vmem:[%s253] sm:$0xff]
        %v255 = vld [vmem:[%s1] sm:$0xff]
        %s256 = sadd.s32 %s251, 8
        %s257 = scalar_lea.vmem [#allocation2], %s256
        %v258 = vld [vmem:[%s257] sm:$0xff]
        %s259 = scalar_lea.vmem %s1, 8
        %v260 = vld [vmem:[%s259] sm:$0xff]
        %vm261 = vcmask 64512
        %v263 = vsel %vm261, %v258, 0
        %265 = vmatprep.subr.mxu0 0.0
        %266 = vmatpush1.msra.mxu0 0.0
        %267 = vmatprep.subr.mxu0 0.0
        %268 = vmatpush1.msra.mxu0 0.0
        %269 = vmatprep.subr.mxu0 0.0
        %270 = vmatpush1.msra.mxu0 0.0
        %271 = vmatprep.subr.mxu0 0.0
        %272 = vmatpush1.msra.mxu0 0.0
        %273 = vmatprep.subr.mxu0 0.0
        %274 = vmatpush1.msra.mxu0 0.0
        %275 = vmatprep.subr.mxu0 0.0
        %276 = vmatpush1.msra.mxu0 0.0
        %277 = vmatprep.subr.mxu0 0.0
        %278 = vmatpush1.msra.mxu0 0.0
        %279 = vmatprep.subr.mxu0 0.0
        %280 = vmatpush1.msra.mxu0 0.0
        %281 = vmatprep.subr.mxu0 0.0
        %282 = vmatpush1.msra.mxu0 0.0
        %283 = vmatprep.subr.mxu0 0.0
        %284 = vmatpush1.msra.mxu0 0.0
        %285 = vmatprep.subr.mxu0 0.0
        %286 = vmatpush1.msra.mxu0 0.0
        %287 = vmatprep.subr.mxu0 0.0
        %288 = vmatpush1.msra.mxu0 0.0
        %289 = vmatprep.subr.mxu0 0.0
        %290 = vmatpush1.msra.mxu0 0.0
        %291 = vmatprep.subr.mxu0 0.0
        %292 = vmatpush1.msra.mxu0 0.0
        %293 = vmatprep.subr.mxu0 0.0
        %294 = vmatpush1.msra.mxu0 0.0
        %295 = vmatprep.subr.mxu0 0.0
        %296 = vmatpush1.msra.mxu0 %v260
        %297 = vmatprep.subr.mxu0 0.0
        %298 = vmatpush2.msra.mxu0 0.0
        %299 = vmatprep.subr.mxu0 0.0
        %300 = vmatpush2.msra.mxu0 0.0
        %301 = vmatprep.subr.mxu0 0.0
        %302 = vmatpush2.msra.mxu0 0.0
        %303 = vmatprep.subr.mxu0 0.0
        %304 = vmatpush2.msra.mxu0 0.0
        %305 = vmatprep.subr.mxu0 0.0
        %306 = vmatpush2.msra.mxu0 0.0
        %307 = vmatprep.subr.mxu0 0.0
        %308 = vmatpush2.msra.mxu0 0.0
        %309 = vmatprep.subr.mxu0 0.0
        %310 = vmatpush2.msra.mxu0 0.0
        %311 = vmatprep.subr.mxu0 0.0
        %312 = vmatpush2.msra.mxu0 0.0
        %313 = vmatprep.subr.mxu0 0.0
        %314 = vmatpush2.msra.mxu0 0.0
        %315 = vmatprep.subr.mxu0 0.0
        %316 = vmatpush2.msra.mxu0 0.0
        %317 = vmatprep.subr.mxu0 0.0
        %318 = vmatpush2.msra.mxu0 0.0
        %319 = vmatprep.subr.mxu0 0.0
        %320 = vmatpush2.msra.mxu0 0.0
        %321 = vmatprep.subr.mxu0 0.0
        %322 = vmatpush2.msra.mxu0 0.0
        %323 = vmatprep.subr.mxu0 0.0
        %324 = vmatpush2.msra.mxu0 0.0
        %325 = vmatprep.subr.mxu0 0.0
        %326 = vmatpush2.msra.mxu0 0.0
        %327 = vmatprep.subr.mxu0 0.0
        %328 = vmatpush2.msra.mxu0 0.0
        %329 = vmatprep.mubr.f32.mxu0 0.0
        %330 = vmatmul.mubr.f32.gmra.mxu0 %v263
        %v331 = vpop.f32.mrf.mxu0
        %v332 = vadd.f32 0.0, %v331
        %v333 = vpop.f32.mrf.mxu0
        %334 = vdwg.mxu0
        %v336 = vsel %vm261, %v254, 0
        %338 = vmatprep.subr.mxu0 0.0
        %339 = vmatpush1.msra.mxu0 0.0
        %340 = vmatprep.subr.mxu0 0.0
        %341 = vmatpush1.msra.mxu0 0.0
        %342 = vmatprep.subr.mxu0 0.0
        %343 = vmatpush1.msra.mxu0 0.0
        %344 = vmatprep.subr.mxu0 0.0
        %345 = vmatpush1.msra.mxu0 0.0
        %346 = vmatprep.subr.mxu0 0.0
        %347 = vmatpush1.msra.mxu0 0.0
        %348 = vmatprep.subr.mxu0 0.0
        %349 = vmatpush1.msra.mxu0 0.0
        %350 = vmatprep.subr.mxu0 0.0
        %351 = vmatpush1.msra.mxu0 0.0
        %352 = vmatprep.subr.mxu0 0.0
        %353 = vmatpush1.msra.mxu0 0.0
        %354 = vmatprep.subr.mxu0 0.0
        %355 = vmatpush1.msra.mxu0 0.0
        %356 = vmatprep.subr.mxu0 0.0
        %357 = vmatpush1.msra.mxu0 0.0
        %358 = vmatprep.subr.mxu0 0.0
        %359 = vmatpush1.msra.mxu0 0.0
        %360 = vmatprep.subr.mxu0 0.0
        %361 = vmatpush1.msra.mxu0 0.0
        %362 = vmatprep.subr.mxu0 0.0
        %363 = vmatpush1.msra.mxu0 0.0
        %364 = vmatprep.subr.mxu0 0.0
        %365 = vmatpush1.msra.mxu0 0.0
        %366 = vmatprep.subr.mxu0 0.0
        %367 = vmatpush1.msra.mxu0 0.0
        %368 = vmatprep.subr.mxu0 0.0
        %369 = vmatpush1.msra.mxu0 %v255
        %370 = vmatprep.subr.mxu0 0.0
        %371 = vmatpush2.msra.mxu0 0.0
        %372 = vmatprep.subr.mxu0 0.0
        %373 = vmatpush2.msra.mxu0 0.0
        %374 = vmatprep.subr.mxu0 0.0
        %375 = vmatpush2.msra.mxu0 0.0
        %376 = vmatprep.subr.mxu0 0.0
        %377 = vmatpush2.msra.mxu0 0.0
        %378 = vmatprep.subr.mxu0 0.0
        %379 = vmatpush2.msra.mxu0 0.0
        %380 = vmatprep.subr.mxu0 0.0
        %381 = vmatpush2.msra.mxu0 0.0
        %382 = vmatprep.subr.mxu0 0.0
        %383 = vmatpush2.msra.mxu0 0.0
        %384 = vmatprep.subr.mxu0 0.0
        %385 = vmatpush2.msra.mxu0 0.0
        %386 = vmatprep.subr.mxu0 0.0
        %387 = vmatpush2.msra.mxu0 0.0
        %388 = vmatprep.subr.mxu0 0.0
        %389 = vmatpush2.msra.mxu0 0.0
        %390 = vmatprep.subr.mxu0 0.0
        %391 = vmatpush2.msra.mxu0 0.0
        %392 = vmatprep.subr.mxu0 0.0
        %393 = vmatpush2.msra.mxu0 0.0
        %394 = vmatprep.subr.mxu0 0.0
        %395 = vmatpush2.msra.mxu0 0.0
        %396 = vmatprep.subr.mxu0 0.0
        %397 = vmatpush2.msra.mxu0 0.0
        %398 = vmatprep.subr.mxu0 0.0
        %399 = vmatpush2.msra.mxu0 0.0
        %400 = vmatprep.subr.mxu0 0.0
        %401 = vmatpush2.msra.mxu0 0.0
        %402 = vmatprep.mubr.f32.mxu0 0.0
        %403 = vmatmul.mubr.f32.gmra.mxu0 %v336
        %v404 = vpop.f32.mrf.mxu0
        %v405 = vadd.f32 %v332, %v404
        %v406 = vpop.f32.mrf.mxu0
        %407 = vdwg.mxu0
        %s408 = sadd.s32 %s251, 9
        %s409 = scalar_lea.vmem [#allocation2], %s408
        %v410 = vld [vmem:[%s409] sm:$0xff]
        %s411 = scalar_lea.vmem %s1, 16
        %v412 = vld [vmem:[%s411] sm:$0xff]
        %v414 = vsel %vm261, %v410, 0
        %416 = vmatprep.subr.mxu0 0.0
        %417 = vmatpush1.msra.mxu0 0.0
        %418 = vmatprep.subr.mxu0 0.0
        %419 = vmatpush1.msra.mxu0 0.0
        %420 = vmatprep.subr.mxu0 0.0
        %421 = vmatpush1.msra.mxu0 0.0
        %422 = vmatprep.subr.mxu0 0.0
        %423 = vmatpush1.msra.mxu0 0.0
        %424 = vmatprep.subr.mxu0 0.0
        %425 = vmatpush1.msra.mxu0 0.0
        %426 = vmatprep.subr.mxu0 0.0
        %427 = vmatpush1.msra.mxu0 0.0
        %428 = vmatprep.subr.mxu0 0.0
        %429 = vmatpush1.msra.mxu0 0.0
        %430 = vmatprep.subr.mxu0 0.0
        %431 = vmatpush1.msra.mxu0 0.0
        %432 = vmatprep.subr.mxu0 0.0
        %433 = vmatpush1.msra.mxu0 0.0
        %434 = vmatprep.subr.mxu0 0.0
        %435 = vmatpush1.msra.mxu0 0.0
        %436 = vmatprep.subr.mxu0 0.0
        %437 = vmatpush1.msra.mxu0 0.0
        %438 = vmatprep.subr.mxu0 0.0
        %439 = vmatpush1.msra.mxu0 0.0
        %440 = vmatprep.subr.mxu0 0.0
        %441 = vmatpush1.msra.mxu0 0.0
        %442 = vmatprep.subr.mxu0 0.0
        %443 = vmatpush1.msra.mxu0 0.0
        %444 = vmatprep.subr.mxu0 0.0
        %445 = vmatpush1.msra.mxu0 0.0
        %446 = vmatprep.subr.mxu0 0.0
        %447 = vmatpush1.msra.mxu0 %v412
        %448 = vmatprep.subr.mxu0 0.0
        %449 = vmatpush2.msra.mxu0 0.0
        %450 = vmatprep.subr.mxu0 0.0
        %451 = vmatpush2.msra.mxu0 0.0
        %452 = vmatprep.subr.mxu0 0.0
        %453 = vmatpush2.msra.mxu0 0.0
        %454 = vmatprep.subr.mxu0 0.0
        %455 = vmatpush2.msra.mxu0 0.0
        %456 = vmatprep.subr.mxu0 0.0
        %457 = vmatpush2.msra.mxu0 0.0
        %458 = vmatprep.subr.mxu0 0.0
        %459 = vmatpush2.msra.mxu0 0.0
        %460 = vmatprep.subr.mxu0 0.0
        %461 = vmatpush2.msra.mxu0 0.0
        %462 = vmatprep.subr.mxu0 0.0
        %463 = vmatpush2.msra.mxu0 0.0
        %464 = vmatprep.subr.mxu0 0.0
        %465 = vmatpush2.msra.mxu0 0.0
        %466 = vmatprep.subr.mxu0 0.0
        %467 = vmatpush2.msra.mxu0 0.0
        %468 = vmatprep.subr.mxu0 0.0
        %469 = vmatpush2.msra.mxu0 0.0
        %470 = vmatprep.subr.mxu0 0.0
        %471 = vmatpush2.msra.mxu0 0.0
        %472 = vmatprep.subr.mxu0 0.0
        %473 = vmatpush2.msra.mxu0 0.0
        %474 = vmatprep.subr.mxu0 0.0
        %475 = vmatpush2.msra.mxu0 0.0
        %476 = vmatprep.subr.mxu0 0.0
        %477 = vmatpush2.msra.mxu0 0.0
        %478 = vmatprep.subr.mxu0 0.0
        %479 = vmatpush2.msra.mxu0 0.0
        %480 = vmatprep.mubr.f32.mxu0 0.0
        %481 = vmatmul.mubr.f32.gmra.mxu0 %v414
        %v482 = vpop.f32.mrf.mxu0
        %v483 = vadd.f32 0.0, %v482
        %v484 = vpop.f32.mrf.mxu0
        %485 = vdwg.mxu0
        %v486 = vadd.f32 %v405, %v483
        %v487 = vld [vmem:[%s2] sm:$0x1]
        %v489 = vlaneseq
        %v490 = vshrl.u32 %v489, 7
        %v491 = vsub.s32 0, %v490
        %v492 = vrot.slane %v487, %v491
        %v494 = vadd.f32 %v486, %v492
        %v495 = vmax.f32 %v494, 0.0
        %vm496 = vcmask 261120
        %v497 = vsel %vm496, %v495, 0.0
        %498 = vadd.xlane.f32.xlu0 %v497
        %v499 = vpop.xlane.xlu0 %498
        %v500 = vrcp.pop 32.0
        %v501 = vmul.f32 %v499, %v500
        %v502 = vsub.f32 %v495, %v501
        %v503 = vmul.f32 %v502, %v502
        %v504 = vsel %vm496, %v503, 0.0
        %505 = vadd.xlane.f32.xlu0 %v504
        %v506 = vpop.xlane.xlu0 %505
        %v507 = vmul.f32 %v506, %v500
        %v508 = vadd.f32 %v507, 1e-05
        %v509 = vrsqrt.pop %v508
        %v510 = vmul.f32 %v502, %v509
        %v511 = vld [vmem:[%s3] sm:$0x1]
        %v513 = vlaneseq
        %v514 = vshrl.u32 %v513, 7
        %v515 = vsub.s32 0, %v514
        %v516 = vrot.slane %v511, %v515
        %v518 = vmul.f32 %v510, %v516
        %v519 = vld [vmem:[%s4] sm:$0x1]
        %v521 = vlaneseq
        %v522 = vshrl.u32 %v521, 7
        %v523 = vsub.s32 0, %v522
        %v524 = vrot.slane %v519, %v523
        %v526 = vadd.f32 %v518, %v524
        %527 = vst.msk [vmem:[%s231] sm:$0xff] %vm496, %v526
        %s528 = sand.u32 %s151, 1
        %s529 = scalar_lea.sflag [#allocation4], %s528
        %s530 = sand.u32 %s151, 1
        %s531 = smul.addr %s530, 8
        %s532 = scalar_lea.vmem [#allocation3], %s531
        // Predicated region
        $region45: #{tpu_custom_call.1} parent=39 // pred_check
          %p533 = pneg %p161
        $region46: #{tpu_custom_call.1} parent=39 // pred_check_branch
          %535 = sbr.rel (%p533) target = $region48
        $region47: #{tpu_custom_call.1} parent=39 // pred_region
          %s537 = ssub.s32 128, 128
          %538 = vsyncadd %s529, %s537
          %s539 = smul.addr %s23, 2
          %s540 = sadd.s32 %s24, %s539
          %s541 = smul.addr %s540, 128
          %s542 = scalar_lea.hbm %s5, %s541
          %s544 = sshll.u32 %s532, 4
          %s545 = int_to_ptr.vmem [resolvable:$true] %s544
          %547 = dma.vmem_to_hbm [thread:$0]  %s545, 128, %s542, %s529
        $region48: #{tpu_custom_call.1} parent=39 // pred_fallthru
          _
      $region40: #{tpu_custom_call.1} parent=5 // pred_fallthru
        _
      %p548 = scmp.le.s32.totalorder 2, %s14
      // Predicated region
      $region49: #{tpu_custom_call.1} parent=5 // pred_check
        %p549 = pneg %p548
      $region50: #{tpu_custom_call.1} parent=5 // pred_check_branch
        %551 = sbr.rel (%p549) target = $region52
      $region51: #{tpu_custom_call.1} parent=5 // pred_region
        %s552 = ssub.s32 %s14, 2
        // Predicated region
        $region53: #{tpu_custom_call.1} parent=51 // pred_check
          %p553 = pneg %p167
        $region54: #{tpu_custom_call.1} parent=51 // pred_check_branch
          %555 = sbr.rel (%p553) target = $region56
        $region55: #{tpu_custom_call.1} parent=51 // pred_region
          %s556 = sand.u32 %s152, 1
          %s557 = scalar_lea.sflag [#allocation4], %s556
          %s558 = sand.u32 %s152, 1
          %s559 = smul.addr %s558, 8
          %s560 = scalar_lea.vmem [#allocation3], %s559
          %561 = dma.done %s557, 128
        $region56: #{tpu_custom_call.1} parent=51 // pred_fallthru
          _
      $region52: #{tpu_custom_call.1} parent=5 // pred_fallthru
        _
    $region6: #{tpu_custom_call.1} parent=1 // loop_footer
      %s18 = sadd.s32 1, %s14
    $region7: #{tpu_custom_call.1} parent=1 // loop_footer_branch
      %13 = sbr.rel target = $region3
    $region8: #{tpu_custom_call.1} parent=1 // loop_exit
      _
    %562 = vsyncpa [#allocation4], 1
    %s563 = scalar_lea.sflag [#allocation4], 1
    %564 = vsyncpa %s563, 1

</llo_original>
